<compile_context>
chip_gen: v6e
topology: v6e:2x2x1
jax: 0.10.0
libtpu: 0.0.40
codegen_flags: <defaults>
</compile_context>

<pallas_src>
import jax
import jax.numpy as jnp
from jax.experimental import pallas as pl
from jax.experimental.pallas import tpu as pltpu


def _aug_kernel(x_ref, sub_ref, inv_ref, wy_ref, wblk_ref, o_ref):
    """Single step: all bands at once, lane-dense in and out.

    x_ref:    VMEM (H, C*W)     image, channels packed into lanes (col = c*W+w)
    sub_ref:  VMEM (1, C*W)     per-column mean        (K.Normalize)
    inv_ref:  VMEM (1, C*W)     per-column 1/std
    wy_ref:   VMEM (OH, H)      height interpolation matrix (v-flip folded in)
    wblk_ref: VMEM (C*W, C*OW)  block-diagonal width interp (h-flip folded in)
    o_ref:    VMEM (OH, C*OW)   lane-dense output slab
    """
    x = x_ref[...]
    xn = (x - sub_ref[...]) * inv_ref[...]                                  # VPU
    tmp = jnp.dot(wy_ref[...], xn, preferred_element_type=jnp.float32)     # MXU
    out = jnp.dot(tmp, wblk_ref[...], preferred_element_type=jnp.float32)  # MXU
    o_ref[...] = out.astype(o_ref.dtype)


def _bilinear_matrix(in_size: int, out_size: int) -> jnp.ndarray:
    """(out_size, in_size) bilinear weights, align_corners=True (K.Resize)."""
    if in_size == 1:
        return jnp.ones((out_size, 1), jnp.float32)
    if out_size == 1:
        src = jnp.zeros((1,), jnp.float32)
    else:
        src = jnp.arange(out_size, dtype=jnp.float32) * (
            (in_size - 1) / (out_size - 1))
    i0 = jnp.clip(jnp.floor(src).astype(jnp.int32), 0, in_size - 2)
    frac = src - i0.astype(jnp.float32)
    rows = jnp.arange(out_size)
    w = jnp.zeros((out_size, in_size), jnp.float32)
    w = w.at[rows, i0].add(1.0 - frac)
    w = w.at[rows, i0 + 1].add(frac)
    return w


class ClsDataAugmentationPallas:
    def __init__(self, split, size, bands, band_stats):
        self.split = split
        self.size = (size, size) if isinstance(size, int) else tuple(size)
        self.bands = bands
        if band_stats is not None:
            self.mean = jnp.asarray(band_stats["mean"], jnp.float32)
            self.std = jnp.asarray(band_stats["std"], jnp.float32)
        else:
            self.mean = jnp.asarray([0.0], jnp.float32)
            self.std = jnp.asarray([1.0], jnp.float32)

    def _run_kernel(self, x_hcw, sub, inv, wy, wblk, oh, c_ow):
        H, CxW = x_hcw.shape
        return pl.pallas_call(
            _aug_kernel,
            out_shape=jax.ShapeDtypeStruct((oh, c_ow), jnp.float32),
            grid=(1,),
            in_specs=[
                pl.BlockSpec((H, CxW), lambda i: (0, 0)),      # image slab
                pl.BlockSpec((1, CxW), lambda i: (0, 0)),      # mean cols
                pl.BlockSpec((1, CxW), lambda i: (0, 0)),      # 1/std cols
                pl.BlockSpec((oh, H), lambda i: (0, 0)),       # Wy
                pl.BlockSpec((CxW, c_ow), lambda i: (0, 0)),   # blockdiag(Wx^T)
            ],
            out_specs=pl.BlockSpec((oh, c_ow), lambda i: (0, 0)),
            compiler_params=pltpu.CompilerParams(
                dimension_semantics=("arbitrary",)),
        )(x_hcw, sub, inv, wy, wblk)

    def __call__(self, sample, *, rng=None):
        img = jnp.asarray(sample["image"], jnp.float32)      # (C, H, W)
        if self.bands == "rgb":
            # sample['image'][1:4, ...].flip(dims=(0,))  ->  channels (3, 2, 1)
            img = img[1:4][::-1]
        C, H, W = img.shape
        OH, OW = self.size

        mean, std = self.mean, self.std
        if mean.shape[0] == 1:                               # scalar stats
            mean = jnp.broadcast_to(mean, (C,))
            std = jnp.broadcast_to(std, (C,))
        else:
            mean, std = mean[:C], std[:C]

        # lane-dense image layout: (C,H,W) -> (H, C*W); column index = c*W + w
        x_hcw = jnp.transpose(img, (1, 0, 2)).reshape(H, C * W)
        sub = jnp.repeat(mean, W).reshape(1, C * W)
        inv = jnp.repeat(1.0 / std, W).reshape(1, C * W)

        wy = _bilinear_matrix(H, OH)                         # (OH, H)
        wx = _bilinear_matrix(W, OW)                         # (OW, W)

        if self.split == "train":
            assert rng is not None, "train split needs an rng key for flips"
            k1, k2 = jax.random.split(rng)
            hflip = jax.random.bernoulli(k1, 0.5)            # RandomHorizontalFlip
            vflip = jax.random.bernoulli(k2, 0.5)            # RandomVerticalFlip
            wy = jnp.where(vflip, wy[::-1], wy)              # flip output rows
            wx = jnp.where(hflip, wx[::-1], wx)              # flip output cols

        # block-diagonal (C*W, C*OW): one Wx^T block per channel
        wblk = jnp.kron(jnp.eye(C, dtype=jnp.float32), wx.T)

        out = self._run_kernel(x_hcw, sub, inv, wy, wblk, OH, C * OW)
        out = out.reshape(OH, C, OW).transpose(1, 0, 2)      # -> (C, OH, OW)
        return out, sample["label"], sample["meta"]


def _reference_jnp(img, mean, std, wy, wx):
    """Pure-jnp reference: normalize then separable bilinear resize."""
    x = (img - mean[:, None, None]) / std[:, None, None]
    return jnp.einsum("oh,chw,pw->cop", wy, x, wx)


if __name__ == "__main__":
    key = jax.random.PRNGKey(0)
    k_img_ms, k_img_rgb, k_flip = jax.random.split(key, 3)

    # ------------- 12-band multispectral, eval split (no flips) -------------
    band_stats = {"mean": [0.10 + 0.05 * i for i in range(12)],
                  "std": [0.20 + 0.01 * i for i in range(12)]}
    aug = ClsDataAugmentationPallas(split="val", size=24, bands="s2",
                                    band_stats=band_stats)
    img_ms = jax.random.normal(k_img_ms, (12, 16, 16), jnp.float32) * 0.3 + 0.4
    sample_ms = {"image": img_ms,
                 "label": jnp.arange(19, dtype=jnp.int32) % 2,
                 "meta": {"id": 0}}
    x_ms, label_ms, meta_ms = aug(sample_ms)
    jax.block_until_ready(x_ms)
    assert x_ms.shape == (12, 24, 24) and x_ms.dtype == jnp.float32

    mean = jnp.asarray(band_stats["mean"], jnp.float32)
    std = jnp.asarray(band_stats["std"], jnp.float32)
    ref_ms = _reference_jnp(img_ms, mean, std,
                            _bilinear_matrix(16, 24), _bilinear_matrix(16, 24))
    assert bool(jnp.allclose(x_ms, ref_ms, atol=1e-5, rtol=1e-5))

    # ------------- rgb bands, train split (random flips), stats=None --------
    aug_rgb = ClsDataAugmentationPallas(split="train", size=32, bands="rgb",
                                        band_stats=None)
    img4 = jax.random.normal(k_img_rgb, (4, 16, 16), jnp.float32)
    sample_rgb = {"image": img4, "label": jnp.zeros((19,), jnp.int32),
                  "meta": {"id": 1}}
    x_rgb, _, _ = aug_rgb(sample_rgb, rng=k_flip)
    jax.block_until_ready(x_rgb)
    assert x_rgb.shape == (3, 32, 32) and x_rgb.dtype == jnp.float32

    # reference with the exact same flip draws
    kk1, kk2 = jax.random.split(k_flip)
    hflip = bool(jax.random.bernoulli(kk1, 0.5))
    vflip = bool(jax.random.bernoulli(kk2, 0.5))
    img_rgb = img4[1:4][::-1]
    ref_rgb = _reference_jnp(img_rgb, jnp.zeros((3,), jnp.float32),
                             jnp.ones((3,), jnp.float32),
                             _bilinear_matrix(16, 32), _bilinear_matrix(16, 32))
    if vflip:
        ref_rgb = ref_rgb[:, ::-1, :]
    if hflip:
        ref_rgb = ref_rgb[:, :, ::-1]
    assert bool(jnp.allclose(x_rgb, ref_rgb, atol=1e-5, rtol=1e-5))

    print("KERNEL_OK")
</pallas_src>

<mosaic_0001>
module attributes {stable_mosaic.version = 11 : i64} {
  func.func @_aug_kernel(%arg0: i32, %arg1: memref<16x192xf32, #tpu.memory_space<vmem>>, %arg2: memref<1x192xf32, #tpu.memory_space<vmem>>, %arg3: memref<1x192xf32, #tpu.memory_space<vmem>>, %arg4: memref<24x16xf32, #tpu.memory_space<vmem>>, %arg5: memref<192x288xf32, #tpu.memory_space<vmem>>, %arg6: memref<24x288xf32, #tpu.memory_space<vmem>>) attributes {dimension_semantics = [#tpu.dimension_semantics<arbitrary>], iteration_bounds = array<i64: 1>, scalar_prefetch = 0 : i64, scratch_operands = 0 : i64, tpu.core_type = #tpu.core_type<tc>, window_params = [{pipeline_mode = #tpu.pipeline_mode<synchronous>, transform_indices = @transform_0, window_bounds = array<i64: 16, 192>}, {pipeline_mode = #tpu.pipeline_mode<synchronous>, transform_indices = @transform_1, window_bounds = array<i64: 1, 192>}, {pipeline_mode = #tpu.pipeline_mode<synchronous>, transform_indices = @transform_2, window_bounds = array<i64: 1, 192>}, {pipeline_mode = #tpu.pipeline_mode<synchronous>, transform_indices = @transform_3, window_bounds = array<i64: 24, 16>}, {pipeline_mode = #tpu.pipeline_mode<synchronous>, transform_indices = @transform_4, window_bounds = array<i64: 192, 288>}, {pipeline_mode = #tpu.pipeline_mode<synchronous>, transform_indices = @transform_5, window_bounds = array<i64: 24, 288>}]} {
    %c0 = arith.constant 0 : index
    %c0_0 = arith.constant 0 : index
    %0 = vector.load %arg1[%c0, %c0_0] : memref<16x192xf32, #tpu.memory_space<vmem>>, vector<16x192xf32>
    %c0_1 = arith.constant 0 : index
    %c0_2 = arith.constant 0 : index
    %1 = vector.load %arg2[%c0_1, %c0_2] : memref<1x192xf32, #tpu.memory_space<vmem>>, vector<1x192xf32>
    %2 = vector.broadcast %1 : vector<1x192xf32> to vector<16x192xf32>
    %3 = arith.subf %0, %2 : vector<16x192xf32>
    %c0_3 = arith.constant 0 : index
    %c0_4 = arith.constant 0 : index
    %4 = vector.load %arg3[%c0_3, %c0_4] : memref<1x192xf32, #tpu.memory_space<vmem>>, vector<1x192xf32>
    %5 = vector.broadcast %4 : vector<1x192xf32> to vector<16x192xf32>
    %6 = arith.mulf %3, %5 : vector<16x192xf32>
    %c0_5 = arith.constant 0 : index
    %c0_6 = arith.constant 0 : index
    %7 = vector.load %arg4[%c0_5, %c0_6] : memref<24x16xf32, #tpu.memory_space<vmem>>, vector<24x16xf32>
    %cst = arith.constant dense<0.000000e+00> : vector<24x192xf32>
    %8 = tpu.matmul %7, %6, %cst {dimension_numbers = #tpu.dot_dimension_numbers<[1], [0], [0], [1], [0, 0, 1, 1], [], []>} : vector<24x16xf32>, vector<16x192xf32>, vector<24x192xf32> -> vector<24x192xf32>
    %c0_7 = arith.constant 0 : index
    %c0_8 = arith.constant 0 : index
    %9 = vector.load %arg5[%c0_7, %c0_8] : memref<192x288xf32, #tpu.memory_space<vmem>>, vector<192x288xf32>
    %cst_9 = arith.constant dense<0.000000e+00> : vector<24x288xf32>
    %10 = tpu.matmul %8, %9, %cst_9 {dimension_numbers = #tpu.dot_dimension_numbers<[1], [0], [0], [1], [0, 0, 1, 1], [], []>} : vector<24x192xf32>, vector<192x288xf32>, vector<24x288xf32> -> vector<24x288xf32>
    %c0_10 = arith.constant 0 : index
    %c0_11 = arith.constant 0 : index
    %11 = vector.load %arg6[%c0_10, %c0_11] : memref<24x288xf32, #tpu.memory_space<vmem>>, vector<24x288xf32>
    tpu.vector_store %arg6[%c0_10, %c0_11], %10 {strides = array<i32>} : memref<24x288xf32, #tpu.memory_space<vmem>>, vector<24x288xf32>,
    return
  }
  func.func @transform_0(%arg0: i32) -> (i32, i32) {
    %c0_i32 = arith.constant 0 : i32
    %c0_i32_0 = arith.constant 0 : i32
    %c0_i32_1 = arith.constant 0 : i32
    return %c0_i32, %c0_i32_0 : i32, i32
  }
  func.func @transform_1(%arg0: i32) -> (i32, i32) {
    %c0_i32 = arith.constant 0 : i32
    %c0_i32_0 = arith.constant 0 : i32
    %c0_i32_1 = arith.constant 0 : i32
    return %c0_i32, %c0_i32_0 : i32, i32
  }
  func.func @transform_2(%arg0: i32) -> (i32, i32) {
    %c0_i32 = arith.constant 0 : i32
    %c0_i32_0 = arith.constant 0 : i32
    %c0_i32_1 = arith.constant 0 : i32
    return %c0_i32, %c0_i32_0 : i32, i32
  }
  func.func @transform_3(%arg0: i32) -> (i32, i32) {
    %c0_i32 = arith.constant 0 : i32
    %c0_i32_0 = arith.constant 0 : i32
    %c0_i32_1 = arith.constant 0 : i32
    return %c0_i32, %c0_i32_0 : i32, i32
  }
  func.func @transform_4(%arg0: i32) -> (i32, i32) {
    %c0_i32 = arith.constant 0 : i32
    %c0_i32_0 = arith.constant 0 : i32
    %c0_i32_1 = arith.constant 0 : i32
    return %c0_i32, %c0_i32_0 : i32, i32
  }
  func.func @transform_5(%arg0: i32) -> (i32, i32) {
    %c0_i32 = arith.constant 0 : i32
    %c0_i32_0 = arith.constant 0 : i32
    %c0_i32_1 = arith.constant 0 : i32
    return %c0_i32, %c0_i32_0 : i32, i32
  }
}

</mosaic_0001>

<llo_original>
// kernel: tpu_custom_call.1
$region0: #{tpu_custom_call.1}
  #allocation0 [shape = 'u32[]', space=smem, size = 0x4, offset = 0x4, fixed_abs, tag = 'smem constant byte address 0x4 - core index']
  #allocation1 [shape = 'u32[144,128]{1,0:T(1,128)}', space=vmem, size = 0x12000, scoped, tag = 'internal scratch']
  %s0 = inlined_call_operand.vmem [shape: f32[16,192], index: 0, kind: input, shape index: {}]
  %s1 = inlined_call_operand.vmem [shape: f32[1,192], index: 1, kind: input, shape index: {}]
  %s2 = inlined_call_operand.vmem [shape: f32[1,192], index: 2, kind: input, shape index: {}]
  %s3 = inlined_call_operand.vmem [shape: f32[24,16], index: 3, kind: input, shape index: {}]
  %s4 = inlined_call_operand.hbm [shape: f32[192,288], index: 4, kind: input, shape index: {}]
  %s5 = inlined_call_operand.hbm [shape: f32[24,288], index: 5, kind: output, shape index: {}]
  %s6 = sld [smem:[#allocation0]]
  $region34: #{tpu_custom_call.1} parent=0
    _
  %s8 = ssub.s32 1, %s6
  %s9 = scalar_select 0, %s8, %s6
  $region1: #{tpu_custom_call.1} parent=0
    #allocation2 [shape = 'u8[294912]{0}', space=vmem, size = 0x48000, scoped, tag = 'input window, operand 4, single buffered']
    #allocation3 [shape = 's32[1]{0}', space=sflag, size = 0x4, scoped, tag = 'scoped memory for tpu_custom_call.1']
    #allocation4 [shape = 's32[1]{0}', space=sflag, size = 0x4, scoped, tag = 'scoped memory for tpu_custom_call.1']
    #allocation5 [shape = 'u8[36864]{0}', space=vmem, size = 0x9000, scoped, tag = 'output window, operand 0, single buffered']
    %10 = vsyncpa [#allocation3], 0
    %11 = vsyncpa [#allocation4], 0
    // Predicated region
    $region2: #{tpu_custom_call.1} parent=1 // pred_check
      _
    $region3: #{tpu_custom_call.1} parent=1 // pred_check_branch
      %13 = sbr.rel (0) target = $region5
    $region4: #{tpu_custom_call.1} parent=1 // pred_region
      _
    $region5: #{tpu_custom_call.1} parent=1 // pred_fallthru
      _
    // Predicated region
    $region6: #{tpu_custom_call.1} parent=1 // pred_check
      _
    $region7: #{tpu_custom_call.1} parent=1 // pred_check_branch
      %15 = sbr.rel (0) target = $region9
    $region8: #{tpu_custom_call.1} parent=1 // pred_region
      _
    $region9: #{tpu_custom_call.1} parent=1 // pred_fallthru
      _
    // Predicated region
    $region10: #{tpu_custom_call.1} parent=1 // pred_check
      _
    $region11: #{tpu_custom_call.1} parent=1 // pred_check_branch
      %17 = sbr.rel (0) target = $region13
    $region12: #{tpu_custom_call.1} parent=1 // pred_region
      _
    $region13: #{tpu_custom_call.1} parent=1 // pred_fallthru
      _
    // Predicated region
    $region14: #{tpu_custom_call.1} parent=1 // pred_check
      _
    $region15: #{tpu_custom_call.1} parent=1 // pred_check_branch
      %19 = sbr.rel (0) target = $region17
    $region16: #{tpu_custom_call.1} parent=1 // pred_region
      _
    $region17: #{tpu_custom_call.1} parent=1 // pred_fallthru
      _
    // Predicated region
    $region18: #{tpu_custom_call.1} parent=1 // pred_check
      _
    $region19: #{tpu_custom_call.1} parent=1 // pred_check_branch
      %21 = sbr.rel (0) target = $region21
    $region20: #{tpu_custom_call.1} parent=1 // pred_region
      %s23 = ssub.s32 9216, 9216
      %24 = vsyncadd [#allocation3], %s23
      %s25 = sshll.u32 [#allocation2], 4
      %s26 = int_to_ptr.vmem [resolvable:$true] %s25
      %31 = dma.hbm_to_vmem [thread:$0]  %s4, 9216, %s26, [#allocation3], 384, 384, 24
    $region21: #{tpu_custom_call.1} parent=1 // pred_fallthru
      _
    // Predicated region
    $region22: #{tpu_custom_call.1} parent=1 // pred_check
      _
    $region23: #{tpu_custom_call.1} parent=1 // pred_check_branch
      %33 = sbr.rel (0) target = $region25
    $region24: #{tpu_custom_call.1} parent=1 // pred_region
      %34 = dma.done [#allocation3], 9216
    $region25: #{tpu_custom_call.1} parent=1 // pred_fallthru
      _
    %v35 = vld [vmem:[%s0] sm:$0xff]
    %v36 = vld [vmem:[%s0 + $0x8] sm:$0xff]
    %v37 = vld [vmem:[%s0 + $0x10] sm:$0xff]
    %v38 = vld [vmem:[%s0 + $0x18] sm:$0xff]
    %v39 = vld [vmem:[%s1] sm:$0x3]
    %v41 = vlaneseq
    %v42 = vshrl.u32 %v41, 7
    %v43 = vsub.s32 0, %v42
    %v44 = vrot.slane %v39, %v43
    %v45 = vlaneseq
    %v46 = vshrl.u32 %v45, 7
    %v47 = vsub.s32 1, %v46
    %v48 = vrot.slane %v39, %v47
    %v51 = vsub.f32 %v35, %v44
    %v52 = vsub.f32 %v36, %v48
    %v53 = vsub.f32 %v37, %v44
    %v54 = vsub.f32 %v38, %v48
    %v55 = vld [vmem:[%s2] sm:$0x3]
    %v57 = vlaneseq
    %v58 = vshrl.u32 %v57, 7
    %v59 = vsub.s32 0, %v58
    %v60 = vrot.slane %v55, %v59
    %v61 = vlaneseq
    %v62 = vshrl.u32 %v61, 7
    %v63 = vsub.s32 1, %v62
    %v64 = vrot.slane %v55, %v63
    %v67 = vmul.f32 %v51, %v60
    %v68 = vmul.f32 %v52, %v64
    %v69 = vmul.f32 %v53, %v60
    %v70 = vmul.f32 %v54, %v64
    %v71 = vld [vmem:[%s3] sm:$0xff]
    %v72 = vld [vmem:[%s3 + $0x8] sm:$0xff]
    %v73 = vld [vmem:[%s3 + $0x10] sm:$0xff]
    %vm74 = vcmask 130048
    %v76 = vsel %vm74, %v71, 0
    %v79 = vsel %vm74, %v72, 0
    %v82 = vsel %vm74, %v73, 0
    %84 = vmatprep.subr.mxu0 0.0
    %85 = vmatpush1.msra.mxu0 0.0
    %86 = vmatprep.subr.mxu0 0.0
    %87 = vmatpush1.msra.mxu0 0.0
    %88 = vmatprep.subr.mxu0 0.0
    %89 = vmatpush1.msra.mxu0 0.0
    %90 = vmatprep.subr.mxu0 0.0
    %91 = vmatpush1.msra.mxu0 0.0
    %92 = vmatprep.subr.mxu0 0.0
    %93 = vmatpush1.msra.mxu0 0.0
    %94 = vmatprep.subr.mxu0 0.0
    %95 = vmatpush1.msra.mxu0 0.0
    %96 = vmatprep.subr.mxu0 0.0
    %97 = vmatpush1.msra.mxu0 0.0
    %98 = vmatprep.subr.mxu0 0.0
    %99 = vmatpush1.msra.mxu0 0.0
    %100 = vmatprep.subr.mxu0 0.0
    %101 = vmatpush1.msra.mxu0 0.0
    %102 = vmatprep.subr.mxu0 0.0
    %103 = vmatpush1.msra.mxu0 0.0
    %104 = vmatprep.subr.mxu0 0.0
    %105 = vmatpush1.msra.mxu0 0.0
    %106 = vmatprep.subr.mxu0 0.0
    %107 = vmatpush1.msra.mxu0 0.0
    %108 = vmatprep.subr.mxu0 0.0
    %109 = vmatpush1.msra.mxu0 0.0
    %110 = vmatprep.subr.mxu0 0.0
    %111 = vmatpush1.msra.mxu0 0.0
    %112 = vmatprep.subr.mxu0 %v70
    %113 = vmatpush1.msra.mxu0 %v69
    %114 = vmatprep.subr.mxu0 %v68
    %115 = vmatpush1.msra.mxu0 %v67
    %116 = vmatprep.subr.mxu0 0.0
    %117 = vmatpush2.msra.mxu0 0.0
    %118 = vmatprep.subr.mxu0 0.0
    %119 = vmatpush2.msra.mxu0 0.0
    %120 = vmatprep.subr.mxu0 0.0
    %121 = vmatpush2.msra.mxu0 0.0
    %122 = vmatprep.subr.mxu0 0.0
    %123 = vmatpush2.msra.mxu0 0.0
    %124 = vmatprep.subr.mxu0 0.0
    %125 = vmatpush2.msra.mxu0 0.0
    %126 = vmatprep.subr.mxu0 0.0
    %127 = vmatpush2.msra.mxu0 0.0
    %128 = vmatprep.subr.mxu0 0.0
    %129 = vmatpush2.msra.mxu0 0.0
    %130 = vmatprep.subr.mxu0 0.0
    %131 = vmatpush2.msra.mxu0 0.0
    %132 = vmatprep.subr.mxu0 0.0
    %133 = vmatpush2.msra.mxu0 0.0
    %134 = vmatprep.subr.mxu0 0.0
    %135 = vmatpush2.msra.mxu0 0.0
    %136 = vmatprep.subr.mxu0 0.0
    %137 = vmatpush2.msra.mxu0 0.0
    %138 = vmatprep.subr.mxu0 0.0
    %139 = vmatpush2.msra.mxu0 0.0
    %140 = vmatprep.subr.mxu0 0.0
    %141 = vmatpush2.msra.mxu0 0.0
    %142 = vmatprep.subr.mxu0 0.0
    %143 = vmatpush2.msra.mxu0 0.0
    %144 = vmatprep.subr.mxu0 0.0
    %145 = vmatpush2.msra.mxu0 0.0
    %146 = vmatprep.subr.mxu0 0.0
    %147 = vmatpush2.msra.mxu0 0.0
    %148 = vmatprep.mubr.f32.mxu0 0.0
    %149 = vmatmul.mubr.f32.gmra.mxu0 %v76
    %v150 = vpop.f32.mrf.mxu0
    %v151 = vadd.f32 0.0, %v150
    %v152 = vpop.f32.mrf.mxu0
    %v153 = vadd.f32 0.0, %v152
    %154 = vmatprep.mubr.f32.mxu0 0.0
    %155 = vmatmul.mubr.f32.gmra.mxu0 %v79
    %v156 = vpop.f32.mrf.mxu0
    %v157 = vadd.f32 0.0, %v156
    %v158 = vpop.f32.mrf.mxu0
    %v159 = vadd.f32 0.0, %v158
    %160 = vmatprep.mubr.f32.mxu0 0.0
    %161 = vmatmul.mubr.f32.gmra.mxu0 %v82
    %v162 = vpop.f32.mrf.mxu0
    %v163 = vadd.f32 0.0, %v162
    %v164 = vpop.f32.mrf.mxu0
    %v165 = vadd.f32 0.0, %v164
    %166 = vdwg.mxu0
    %v167 = vld [vmem:[#allocation2] sm:$0xff]
    %v168 = vld [vmem:[#allocation2 + $0x8] sm:$0xff]
    %v169 = vld [vmem:[#allocation2 + $0x10] sm:$0xff]
    %v170 = vld [vmem:[#allocation2 + $0x18] sm:$0xff]
    %v171 = vld [vmem:[#allocation2 + $0x20] sm:$0xff]
    %v172 = vld [vmem:[#allocation2 + $0x28] sm:$0xff]
    %v173 = vld [vmem:[#allocation2 + $0x30] sm:$0xff]
    %v174 = vld [vmem:[#allocation2 + $0x38] sm:$0xff]
    %v175 = vld [vmem:[#allocation2 + $0x40] sm:$0xff]
    %v176 = vld [vmem:[#allocation2 + $0x48] sm:$0xff]
    %v177 = vld [vmem:[#allocation2 + $0x50] sm:$0xff]
    %v178 = vld [vmem:[#allocation2 + $0x58] sm:$0xff]
    %v179 = vld [vmem:[#allocation2 + $0x60] sm:$0xff]
    %v180 = vld [vmem:[#allocation2 + $0x68] sm:$0xff]
    %v181 = vld [vmem:[#allocation2 + $0x70] sm:$0xff]
    %v182 = vld [vmem:[#allocation2 + $0x78] sm:$0xff]
    %v183 = vld [vmem:[#allocation2 + $0x80] sm:$0xff]
    %v184 = vld [vmem:[#allocation2 + $0x88] sm:$0xff]
    %v185 = vld [vmem:[#allocation2 + $0x90] sm:$0xff]
    %v186 = vld [vmem:[#allocation2 + $0x98] sm:$0xff]
    %v187 = vld [vmem:[#allocation2 + $0xa0] sm:$0xff]
    %v188 = vld [vmem:[#allocation2 + $0xa8] sm:$0xff]
    %v189 = vld [vmem:[#allocation2 + $0xb0] sm:$0xff]
    %v190 = vld [vmem:[#allocation2 + $0xb8] sm:$0xff]
    %v191 = vld [vmem:[#allocation2 + $0xc0] sm:$0xff]
    %v192 = vld [vmem:[#allocation2 + $0xc8] sm:$0xff]
    %v193 = vld [vmem:[#allocation2 + $0xd0] sm:$0xff]
    %v194 = vld [vmem:[#allocation2 + $0xd8] sm:$0xff]
    %v195 = vld [vmem:[#allocation2 + $0xe0] sm:$0xff]
    %v196 = vld [vmem:[#allocation2 + $0xe8] sm:$0xff]
    %v197 = vld [vmem:[#allocation2 + $0xf0] sm:$0xff]
    %v198 = vld [vmem:[#allocation2 + $0xf8] sm:$0xff]
    %v199 = vld [vmem:[#allocation2 + $0x100] sm:$0xff]
    %v200 = vld [vmem:[#allocation2 + $0x108] sm:$0xff]
    %v201 = vld [vmem:[#allocation2 + $0x110] sm:$0xff]
    %v202 = vld [vmem:[#allocation2 + $0x118] sm:$0xff]
    %v203 = vld [vmem:[#allocation2 + $0x120] sm:$0xff]
    %v204 = vld [vmem:[#allocation2 + $0x128] sm:$0xff]
    %v205 = vld [vmem:[#allocation2 + $0x130] sm:$0xff]
    %v206 = vld [vmem:[#allocation2 + $0x138] sm:$0xff]
    %v207 = vld [vmem:[#allocation2 + $0x140] sm:$0xff]
    %v208 = vld [vmem:[#allocation2 + $0x148] sm:$0xff]
    %v209 = vld [vmem:[#allocation2 + $0x150] sm:$0xff]
    %v210 = vld [vmem:[#allocation2 + $0x158] sm:$0xff]
    %v211 = vld [vmem:[#allocation2 + $0x160] sm:$0xff]
    %v212 = vld [vmem:[#allocation2 + $0x168] sm:$0xff]
    %v213 = vld [vmem:[#allocation2 + $0x170] sm:$0xff]
    %v214 = vld [vmem:[#allocation2 + $0x178] sm:$0xff]
    %v215 = vld [vmem:[#allocation2 + $0x180] sm:$0xff]
    %v216 = vld [vmem:[#allocation2 + $0x188] sm:$0xff]
    %v217 = vld [vmem:[#allocation2 + $0x190] sm:$0xff]
    %v218 = vld [vmem:[#allocation2 + $0x198] sm:$0xff]
    %v219 = vld [vmem:[#allocation2 + $0x1a0] sm:$0xff]
    %v220 = vld [vmem:[#allocation2 + $0x1a8] sm:$0xff]
    %v221 = vld [vmem:[#allocation2 + $0x1b0] sm:$0xff]
    %v222 = vld [vmem:[#allocation2 + $0x1b8] sm:$0xff]
    %v223 = vld [vmem:[#allocation2 + $0x1c0] sm:$0xff]
    %v224 = vld [vmem:[#allocation2 + $0x1c8] sm:$0xff]
    %v225 = vld [vmem:[#allocation2 + $0x1d0] sm:$0xff]
    %v226 = vld [vmem:[#allocation2 + $0x1d8] sm:$0xff]
    %v227 = vld [vmem:[#allocation2 + $0x1e0] sm:$0xff]
    %v228 = vld [vmem:[#allocation2 + $0x1e8] sm:$0xff]
    %v229 = vld [vmem:[#allocation2 + $0x1f0] sm:$0xff]
    %v230 = vld [vmem:[#allocation2 + $0x1f8] sm:$0xff]
    %v231 = vld [vmem:[#allocation2 + $0x200] sm:$0xff]
    %v232 = vld [vmem:[#allocation2 + $0x208] sm:$0xff]
    %v233 = vld [vmem:[#allocation2 + $0x210] sm:$0xff]
    %v234 = vld [vmem:[#allocation2 + $0x218] sm:$0xff]
    %v235 = vld [vmem:[#allocation2 + $0x220] sm:$0xff]
    %v236 = vld [vmem:[#allocation2 + $0x228] sm:$0xff]
    %v237 = vld [vmem:[#allocation2 + $0x230] sm:$0xff]
    %v238 = vld [vmem:[#allocation2 + $0x238] sm:$0xff]
    %vm239 = vcmask 523264
    %v241 = vsel %vm239, %v153, 0
    %v244 = vsel %vm239, %v159, 0
    %v247 = vsel %vm239, %v165, 0
    %249 = vmatprep.subr.mxu0 %v213
    %250 = vmatpush1.msra.mxu0 %v212
    %251 = vmatprep.subr.mxu0 %v210
    %252 = vmatpush1.msra.mxu0 %v209
    %253 = vmatprep.subr.mxu0 %v207
    %254 = vmatpush1.msra.mxu0 %v206
    %255 = vmatprep.subr.mxu0 %v204
    %256 = vmatpush1.msra.mxu0 %v203
    %257 = vmatprep.subr.mxu0 %v201
    %258 = vmatpush1.msra.mxu0 %v200
    %259 = vmatprep.subr.mxu0 %v198
    %260 = vmatpush1.msra.mxu0 %v197
    %261 = vmatprep.subr.mxu0 %v195
    %262 = vmatpush1.msra.mxu0 %v194
    %263 = vmatprep.subr.mxu0 %v192
    %264 = vmatpush1.msra.mxu0 %v191
    %265 = vmatprep.subr.mxu0 %v189
    %266 = vmatpush1.msra.mxu0 %v188
    %267 = vmatprep.subr.mxu0 %v186
    %268 = vmatpush1.msra.mxu0 %v185
    %269 = vmatprep.subr.mxu0 %v183
    %270 = vmatpush1.msra.mxu0 %v182
    %271 = vmatprep.subr.mxu0 %v180
    %272 = vmatpush1.msra.mxu0 %v179
    %273 = vmatprep.subr.mxu0 %v177
    %274 = vmatpush1.msra.mxu0 %v176
    %275 = vmatprep.subr.mxu0 %v174
    %276 = vmatpush1.msra.mxu0 %v173
    %277 = vmatprep.subr.mxu0 %v171
    %278 = vmatpush1.msra.mxu0 %v170
    %279 = vmatprep.subr.mxu0 %v168
    %280 = vmatpush1.msra.mxu0 %v167
    %281 = vmatprep.subr.mxu0 0.0
    %282 = vmatpush2.msra.mxu0 0.0
    %283 = vmatprep.subr.mxu0 0.0
    %284 = vmatpush2.msra.mxu0 0.0
    %285 = vmatprep.subr.mxu0 0.0
    %286 = vmatpush2.msra.mxu0 0.0
    %287 = vmatprep.subr.mxu0 0.0
    %288 = vmatpush2.msra.mxu0 0.0
    %289 = vmatprep.subr.mxu0 0.0
    %290 = vmatpush2.msra.mxu0 0.0
    %291 = vmatprep.subr.mxu0 0.0
    %292 = vmatpush2.msra.mxu0 0.0
    %293 = vmatprep.subr.mxu0 0.0
    %294 = vmatpush2.msra.mxu0 0.0
    %295 = vmatprep.subr.mxu0 0.0
    %296 = vmatpush2.msra.mxu0 0.0
    %297 = vmatprep.subr.mxu0 %v237
    %298 = vmatpush2.msra.mxu0 %v236
    %299 = vmatprep.subr.mxu0 %v234
    %300 = vmatpush2.msra.mxu0 %v233
    %301 = vmatprep.subr.mxu0 %v231
    %302 = vmatpush2.msra.mxu0 %v230
    %303 = vmatprep.subr.mxu0 %v228
    %304 = vmatpush2.msra.mxu0 %v227
    %305 = vmatprep.subr.mxu0 %v225
    %306 = vmatpush2.msra.mxu0 %v224
    %307 = vmatprep.subr.mxu0 %v222
    %308 = vmatpush2.msra.mxu0 %v221
    %309 = vmatprep.subr.mxu0 %v219
    %310 = vmatpush2.msra.mxu0 %v218
    %311 = vmatprep.subr.mxu0 %v216
    %312 = vmatpush2.msra.mxu0 %v215
    %313 = vmatprep.mubr.f32.mxu0 %v241
    %314 = vmatmul.mubr.f32.gmra.mxu0 %v151
    %v315 = vpop.f32.mrf.mxu0
    %v316 = vadd.f32 0.0, %v315
    %v317 = vpop.f32.mrf.mxu0
    %v318 = vadd.f32 0.0, %v317
    %319 = vmatprep.mubr.f32.mxu0 %v244
    %320 = vmatmul.mubr.f32.gmra.mxu0 %v157
    %v321 = vpop.f32.mrf.mxu0
    %v322 = vadd.f32 0.0, %v321
    %v323 = vpop.f32.mrf.mxu0
    %v324 = vadd.f32 0.0, %v323
    %325 = vmatprep.mubr.f32.mxu0 %v247
    %326 = vmatmul.mubr.f32.gmra.mxu0 %v163
    %v327 = vpop.f32.mrf.mxu0
    %v328 = vadd.f32 0.0, %v327
    %v329 = vpop.f32.mrf.mxu0
    %v330 = vadd.f32 0.0, %v329
    %331 = vdwg.mxu0
    %332 = vmatprep.subr.mxu0 0.0
    %333 = vmatpush1.msra.mxu0 %v214
    %334 = vmatprep.subr.mxu0 0.0
    %335 = vmatpush1.msra.mxu0 %v211
    %336 = vmatprep.subr.mxu0 0.0
    %337 = vmatpush1.msra.mxu0 %v208
    %338 = vmatprep.subr.mxu0 0.0
    %339 = vmatpush1.msra.mxu0 %v205
    %340 = vmatprep.subr.mxu0 0.0
    %341 = vmatpush1.msra.mxu0 %v202
    %342 = vmatprep.subr.mxu0 0.0
    %343 = vmatpush1.msra.mxu0 %v199
    %344 = vmatprep.subr.mxu0 0.0
    %345 = vmatpush1.msra.mxu0 %v196
    %346 = vmatprep.subr.mxu0 0.0
    %347 = vmatpush1.msra.mxu0 %v193
    %348 = vmatprep.subr.mxu0 0.0
    %349 = vmatpush1.msra.mxu0 %v190
    %350 = vmatprep.subr.mxu0 0.0
    %351 = vmatpush1.msra.mxu0 %v187
    %352 = vmatprep.subr.mxu0 0.0
    %353 = vmatpush1.msra.mxu0 %v184
    %354 = vmatprep.subr.mxu0 0.0
    %355 = vmatpush1.msra.mxu0 %v181
    %356 = vmatprep.subr.mxu0 0.0
    %357 = vmatpush1.msra.mxu0 %v178
    %358 = vmatprep.subr.mxu0 0.0
    %359 = vmatpush1.msra.mxu0 %v175
    %360 = vmatprep.subr.mxu0 0.0
    %361 = vmatpush1.msra.mxu0 %v172
    %362 = vmatprep.subr.mxu0 0.0
    %363 = vmatpush1.msra.mxu0 %v169
    %364 = vmatprep.subr.mxu0 0.0
    %365 = vmatpush2.msra.mxu0 0.0
    %366 = vmatprep.subr.mxu0 0.0
    %367 = vmatpush2.msra.mxu0 0.0
    %368 = vmatprep.subr.mxu0 0.0
    %369 = vmatpush2.msra.mxu0 0.0
    %370 = vmatprep.subr.mxu0 0.0
    %371 = vmatpush2.msra.mxu0 0.0
    %372 = vmatprep.subr.mxu0 0.0
    %373 = vmatpush2.msra.mxu0 0.0
    %374 = vmatprep.subr.mxu0 0.0
    %375 = vmatpush2.msra.mxu0 0.0
    %376 = vmatprep.subr.mxu0 0.0
    %377 = vmatpush2.msra.mxu0 0.0
    %378 = vmatprep.subr.mxu0 0.0
    %379 = vmatpush2.msra.mxu0 0.0
    %380 = vmatprep.subr.mxu0 0.0
    %381 = vmatpush2.msra.mxu0 %v238
    %382 = vmatprep.subr.mxu0 0.0
    %383 = vmatpush2.msra.mxu0 %v235
    %384 = vmatprep.subr.mxu0 0.0
    %385 = vmatpush2.msra.mxu0 %v232
    %386 = vmatprep.subr.mxu0 0.0
    %387 = vmatpush2.msra.mxu0 %v229
    %388 = vmatprep.subr.mxu0 0.0
    %389 = vmatpush2.msra.mxu0 %v226
    %390 = vmatprep.subr.mxu0 0.0
    %391 = vmatpush2.msra.mxu0 %v223
    %392 = vmatprep.subr.mxu0 0.0
    %393 = vmatpush2.msra.mxu0 %v220
    %394 = vmatprep.subr.mxu0 0.0
    %395 = vmatpush2.msra.mxu0 %v217
    %396 = vmatprep.mubr.f32.mxu0 %v241
    %397 = vmatmul.mubr.f32.gmra.mxu0 %v151
    %v398 = vpop.f32.mrf.mxu0
    %v399 = vadd.f32 0.0, %v398
    %v400 = vpop.f32.mrf.mxu0
    %401 = vmatprep.mubr.f32.mxu0 %v244
    %402 = vmatmul.mubr.f32.gmra.mxu0 %v157
    %v403 = vpop.f32.mrf.mxu0
    %v404 = vadd.f32 0.0, %v403
    %v405 = vpop.f32.mrf.mxu0
    %406 = vmatprep.mubr.f32.mxu0 %v247
    %407 = vmatmul.mubr.f32.gmra.mxu0 %v163
    %v408 = vpop.f32.mrf.mxu0
    %v409 = vadd.f32 0.0, %v408
    %v410 = vpop.f32.mrf.mxu0
    %411 = vdwg.mxu0
    %412 = vst [vmem:[#allocation5] sm:$0xff] %v316
    %413 = vst [vmem:[#allocation5 + $0x8] sm:$0xff] %v318
    %vm414 = vcmask 261120
    %415 = vst.msk [vmem:[#allocation5 + $0x10] sm:$0xff] %vm414, %v399
    %416 = vst [vmem:[#allocation5 + $0x18] sm:$0xff] %v322
    %417 = vst [vmem:[#allocation5 + $0x20] sm:$0xff] %v324
    %418 = vst.msk [vmem:[#allocation5 + $0x28] sm:$0xff] %vm414, %v404
    %419 = vst [vmem:[#allocation5 + $0x30] sm:$0xff] %v328
    %420 = vst [vmem:[#allocation5 + $0x38] sm:$0xff] %v330
    %421 = vst.msk [vmem:[#allocation5 + $0x40] sm:$0xff] %vm414, %v409
    // Predicated region
    $region26: #{tpu_custom_call.1} parent=1 // pred_check
      _
    $region27: #{tpu_custom_call.1} parent=1 // pred_check_branch
      %423 = sbr.rel (0) target = $region29
    $region28: #{tpu_custom_call.1} parent=1 // pred_region
      %s425 = ssub.s32 1152, 1152
      %426 = vsyncadd [#allocation4], %s425
      %s427 = sshll.u32 [#allocation5], 4
      %s428 = int_to_ptr.vmem [resolvable:$true] %s427
      %433 = dma.vmem_to_hbm [thread:$0]  %s428, 1152, %s5, [#allocation4], 384, 384, 24
    $region29: #{tpu_custom_call.1} parent=1 // pred_fallthru
      _
    // Predicated region
    $region30: #{tpu_custom_call.1} parent=1 // pred_check
      _
    $region31: #{tpu_custom_call.1} parent=1 // pred_check_branch
      %435 = sbr.rel (0) target = $region33
    $region32: #{tpu_custom_call.1} parent=1 // pred_region
      %436 = dma.done [#allocation4], 1152
    $region33: #{tpu_custom_call.1} parent=1 // pred_fallthru
      _
    %437 = vsyncpa [#allocation3], 1
    %438 = vsyncpa [#allocation4], 1

</llo_original>
